<compile_context>
chip_gen: v7x
topology: tpu7x:2x2x1
jax: 0.10.0
libtpu: 0.0.40
codegen_flags: <defaults>
</compile_context>

<pallas_src>
import functools

import jax
import jax.numpy as jnp
from jax.experimental import pallas as pl
from jax.experimental.pallas import tpu as pltpu

LANE = 128      # TPU lane width (last-dim tile)
SUBLANE = 8     # f32 sublane tile (second-to-last dim)


def _round_up(x, m):
    return ((x + m - 1) // m) * m


def prepare_params(weight, bias):
    """One-time (init-time) prep of the Linear parameters.

    weight: (n_output, n_input) PyTorch layout -> (n_input, n_pad) lane-dense,
            pre-transposed, zero columns appended.
    bias:   (n_output,)                        -> (1, n_pad), zeros appended.
    """
    n_output, n_input = weight.shape
    n_pad = _round_up(n_output, LANE)
    w_t = jnp.zeros((n_input, n_pad), weight.dtype).at[:, :n_output].set(weight.T)
    b_pad = jnp.zeros((1, n_pad), bias.dtype).at[0, :n_output].set(bias)
    return w_t, b_pad


def _linear_kernel(x_ref, w_ref, b_ref, o_ref, acc_ref):
    # x_ref: (tb, tk); w_ref: (tk, n_pad) lane-dense; b_ref: (1, n_pad)
    # acc_ref: (tb, n_pad) f32 accumulator across the K grid axis.
    k = pl.program_id(1)

    @pl.when(k == 0)
    def _():
        acc_ref[...] = jnp.zeros_like(acc_ref)

    acc_ref[...] += jnp.dot(x_ref[...], w_ref[...],
                            preferred_element_type=jnp.float32)

    @pl.when(k == pl.num_programs(1) - 1)
    def _():
        o_ref[...] = (acc_ref[...] + b_ref[...].astype(jnp.float32)).astype(o_ref.dtype)


def _vmem_budget():
    """Returns (physical VMEM/core, usable budget, per-generation batch-row cap)."""
    try:
        cap = int(pltpu.get_tpu_info().vmem_capacity_bytes)
    except Exception:
        cap = 64 << 20                      # conservative: fits every TPU generation
    if cap <= (64 << 20):                   # v7x-class part: 64 MiB per TensorCore
        return cap, cap - (12 << 20), 1024
    # v5e / v6e: 128 MiB physical; leave headroom for compiler scratch.
    return cap, cap - (20 << 20), 2048


def _choose_tk(n_input, n_pad, itemsize, budget):
    """Keep the whole K resident (single-buffered weight) unless it is too big."""
    w_resident = _round_up(n_input, SUBLANE) * n_pad * itemsize
    if w_resident <= budget // 3:
        return n_input
    for tk in (2048, 1024, 512, 256, 128):
        if n_input % tk == 0:               # exact K tiles -> no garbage in the reduction
            return tk
    # TODO(synk): mask partial K tiles so huge, non-128-divisible n_input can be K-tiled.
    return n_input


def _choose_tb(B, row_cap):
    """Batch-tile rows: as big as VMEM allows, but split into ~4 grid steps when B
    permits so both v7x TensorCores and the double-buffered pipeline engage."""
    row_cap = max(SUBLANE, (row_cap // SUBLANE) * SUBLANE)
    if B <= row_cap and B <= 256:
        return B                            # single tile; block == full batch dim
    gran = 128 if (row_cap >= 128 and B >= 128) else SUBLANE   # 128 = MXU-native rows
    want = _round_up(pl.cdiv(B, 4), gran)
    tb = min(max(gran, want), (row_cap // gran) * gran)
    return max(gran, tb)


@functools.partial(jax.jit, static_argnames=("n_output", "return_padded"))
def regressao_softmax_forward(x, w_t, b_pad, *, n_output, return_padded=False):
    """y = x @ W^T + b, using params pre-padded/pre-transposed by prepare_params()."""
    B, n_input = x.shape
    k_dim, n_pad = w_t.shape
    assert k_dim == n_input and n_pad % LANE == 0
    itemsize = jnp.dtype(x.dtype).itemsize

    cap, budget, gen_row_cap = _vmem_budget()

    tk = _choose_tk(n_input, n_pad, itemsize, budget)
    num_k = pl.cdiv(n_input, tk)

    # VMEM footprint with (8,128) layout padding (sublane x lane tiles).
    k_lanes = _round_up(tk, LANE)                          # x tile lane padding
    w_tile = _round_up(tk, SUBLANE) * n_pad * itemsize
    w_bufs = 1 if num_k == 1 else 2                        # resident vs. streamed (double-buffered)
    bias_bytes = SUBLANE * n_pad * itemsize
    fixed = w_bufs * w_tile + bias_bytes + (2 << 20)       # + compiler scratch slack
    per_row = (2 * k_lanes + 2 * n_pad) * itemsize + n_pad * 4   # x (x2) + out (x2) + f32 acc
    row_cap = min(max((budget - fixed) // per_row, SUBLANE), gen_row_cap)

    tb = _choose_tb(B, row_cap)
    grid = (pl.cdiv(B, tb), num_k)

    need = fixed + _round_up(tb, SUBLANE) * per_row
    vmem_limit = int(min(max(need + (4 << 20), 16 << 20), cap - (4 << 20)))

    cost = pl.CostEstimate(
        flops=2 * B * n_input * n_pad,
        transcendentals=0,
        bytes_accessed=int((B * n_input
                            + (1 if num_k == 1 else grid[0]) * n_input * n_pad
                            + n_pad + B * n_pad) * itemsize),
    )

    # Constant-index operands: place whole in VMEM -> single-buffered, no revolving
    # copy (the review's pl.Buffered(1) intent, via a simpler mechanism).
    resident_vmem = pl.BlockSpec(memory_space=pltpu.MemorySpace.VMEM)
    if num_k == 1:
        w_spec = resident_vmem
    else:
        w_spec = pl.BlockSpec((tk, n_pad), lambda i, k: (k, 0))   # stream K tiles

    y_pad = pl.pallas_call(
        _linear_kernel,
        out_shape=jax.ShapeDtypeStruct((B, n_pad), x.dtype),
        grid_spec=pltpu.PrefetchScalarGridSpec(
            num_scalar_prefetch=0,
            grid=grid,
            in_specs=[
                pl.BlockSpec((tb, tk), lambda i, k: (i, k)),      # stream x tiles
                w_spec,                                           # weight
                resident_vmem,                                    # bias
            ],
            out_specs=pl.BlockSpec((tb, n_pad), lambda i, k: (i, 0)),
            scratch_shapes=[pltpu.VMEM((tb, n_pad), jnp.float32)],
        ),
        compiler_params=pltpu.CompilerParams(
            dimension_semantics=("parallel", "arbitrary"),        # batch tiles -> both TCs on v7x
            vmem_limit_bytes=vmem_limit,
        ),
        cost_estimate=cost,
    )(x, w_t, b_pad)

    if return_padded:
        # Lane-dense (B, n_pad) logits: lets a downstream softmax/loss consume them
        # without the extra un-pad HBM round trip.
        return y_pad
    # TODO(synk): if a downstream softmax follows, fuse it into the kernel epilogue
    # (EUP slot is idle here) instead of re-reading the logits for this slice.
    return y_pad[:, :n_output]


if __name__ == "__main__":
    # Small shapes consistent with nn.Linear(n_input, n_output).
    B, n_input, n_output = 8, 32, 10

    key = jax.random.PRNGKey(0)
    kx, kw, kb = jax.random.split(key, 3)

    # Deterministic parameter init mimicking PyTorch Linear default
    # (uniform in [-1/sqrt(n_input), 1/sqrt(n_input)]).
    bound = 1.0 / jnp.sqrt(jnp.float32(n_input))
    weight = jax.random.uniform(kw, (n_output, n_input), jnp.float32, -bound, bound)
    bias = jax.random.uniform(kb, (n_output,), jnp.float32, -bound, bound)

    x = jax.random.normal(kx, (B, n_input), jnp.float32)

    # One-time param prep (transpose + lane padding) — init-time, not per call.
    w_t, b_pad = prepare_params(weight, bias)

    y = regressao_softmax_forward(x, w_t, b_pad, n_output=n_output)
    jax.block_until_ready(y)

    # Sanity check against plain-JAX reference.
    y_ref = x @ weight.T + bias
    assert y.shape == (B, n_output)
    assert jnp.allclose(y, y_ref, atol=1e-5, rtol=1e-5)

    print("KERNEL_OK")
</pallas_src>

<mosaic_0001>
module attributes {stable_mosaic.version = 11 : i64} {
  func.func @_linear_kernel(%arg0: i32, %arg1: i32, %arg2: memref<8x32xf32, #tpu.memory_space<vmem>>, %arg3: memref<32x128xf32, #tpu.memory_space<vmem>>, %arg4: memref<1x128xf32, #tpu.memory_space<vmem>>, %arg5: memref<8x128xf32, #tpu.memory_space<vmem>>, %arg6: memref<8x128xf32, #tpu.memory_space<vmem>>) attributes {dimension_semantics = [#tpu.dimension_semantics<parallel>, #tpu.dimension_semantics<arbitrary>], iteration_bounds = array<i64: 1, 1>, scalar_prefetch = 0 : i64, scratch_operands = 1 : i64, tpu.core_type = #tpu.core_type<tc>, window_params = [{transform_indices = @transform_0, window_bounds = array<i64: 8, 32>}, {pipeline_mode = #tpu.pipeline_mode<synchronous>, transform_indices = @transform_1, window_bounds = array<i64: 32, 128>}, {pipeline_mode = #tpu.pipeline_mode<synchronous>, transform_indices = @transform_2, window_bounds = array<i64: 1, 128>}, {transform_indices = @transform_3, window_bounds = array<i64: 8, 128>}]} {
    %c0_i32 = arith.constant 0 : i32
    %0 = arith.cmpi eq, %arg1, %c0_i32 : i32
    %1 = arith.extui %0 : i1 to i32
    %c0_i32_0 = arith.constant 0 : i32
    %2 = arith.cmpi ne, %1, %c0_i32_0 : i32
    scf.if %2 {
      %cst_10 = arith.constant 0.000000e+00 : f32
      %12 = vector.broadcast %cst_10 : f32 to vector<8x128xf32>
      %c0_11 = arith.constant 0 : index
      %c0_12 = arith.constant 0 : index
      %13 = vector.load %arg6[%c0_11, %c0_12] : memref<8x128xf32, #tpu.memory_space<vmem>>, vector<8x128xf32>
      tpu.vector_store %arg6[%c0_11, %c0_12], %12 {strides = array<i32>} : memref<8x128xf32, #tpu.memory_space<vmem>>, vector<8x128xf32>,
    } else {
    }
    %c0 = arith.constant 0 : index
    %c0_1 = arith.constant 0 : index
    %3 = vector.load %arg6[%c0, %c0_1] : memref<8x128xf32, #tpu.memory_space<vmem>>, vector<8x128xf32>
    %c0_2 = arith.constant 0 : index
    %c0_3 = arith.constant 0 : index
    %4 = vector.load %arg2[%c0_2, %c0_3] : memref<8x32xf32, #tpu.memory_space<vmem>>, vector<8x32xf32>
    %c0_4 = arith.constant 0 : index
    %c0_5 = arith.constant 0 : index
    %5 = vector.load %arg3[%c0_4, %c0_5] : memref<32x128xf32, #tpu.memory_space<vmem>>, vector<32x128xf32>
    %cst = arith.constant dense<0.000000e+00> : vector<8x128xf32>
    %6 = tpu.matmul %4, %5, %cst {dimension_numbers = #tpu.dot_dimension_numbers<[1], [0], [0], [1], [0, 0, 1, 1], [], []>} : vector<8x32xf32>, vector<32x128xf32>, vector<8x128xf32> -> vector<8x128xf32>
    %7 = arith.addf %3, %6 : vector<8x128xf32>
    %c0_6 = arith.constant 0 : index
    %c0_7 = arith.constant 0 : index
    %8 = vector.load %arg6[%c0_6, %c0_7] : memref<8x128xf32, #tpu.memory_space<vmem>>, vector<8x128xf32>
    tpu.vector_store %arg6[%c0_6, %c0_7], %7 {strides = array<i32>} : memref<8x128xf32, #tpu.memory_space<vmem>>, vector<8x128xf32>,
    %c0_i32_8 = arith.constant 0 : i32
    %9 = arith.cmpi eq, %arg1, %c0_i32_8 : i32
    %10 = arith.extui %9 : i1 to i32
    %c0_i32_9 = arith.constant 0 : i32
    %11 = arith.cmpi ne, %10, %c0_i32_9 : i32
    scf.if %11 {
      %c0_10 = arith.constant 0 : index
      %c0_11 = arith.constant 0 : index
      %12 = vector.load %arg6[%c0_10, %c0_11] : memref<8x128xf32, #tpu.memory_space<vmem>>, vector<8x128xf32>
      %c0_12 = arith.constant 0 : index
      %c0_13 = arith.constant 0 : index
      %13 = vector.load %arg4[%c0_12, %c0_13] : memref<1x128xf32, #tpu.memory_space<vmem>>, vector<1x128xf32>
      %14 = vector.broadcast %13 : vector<1x128xf32> to vector<8x128xf32>
      %15 = arith.addf %12, %14 : vector<8x128xf32>
      %c0_14 = arith.constant 0 : index
      %c0_15 = arith.constant 0 : index
      %16 = vector.load %arg5[%c0_14, %c0_15] : memref<8x128xf32, #tpu.memory_space<vmem>>, vector<8x128xf32>
      tpu.vector_store %arg5[%c0_14, %c0_15], %15 {strides = array<i32>} : memref<8x128xf32, #tpu.memory_space<vmem>>, vector<8x128xf32>,
    } else {
    }
    return
  }
  func.func @transform_0(%arg0: i32, %arg1: i32) -> (i32, i32) {
    %c0_i32 = arith.constant 0 : i32
    return %arg0, %arg1 : i32, i32
  }
  func.func @transform_1(%arg0: i32, %arg1: i32) -> (i32, i32) {
    %c0_i32 = arith.constant 0 : i32
    %c0_i32_0 = arith.constant 0 : i32
    %c0_i32_1 = arith.constant 0 : i32
    return %c0_i32, %c0_i32_0 : i32, i32
  }
  func.func @transform_2(%arg0: i32, %arg1: i32) -> (i32, i32) {
    %c0_i32 = arith.constant 0 : i32
    %c0_i32_0 = arith.constant 0 : i32
    %c0_i32_1 = arith.constant 0 : i32
    return %c0_i32, %c0_i32_0 : i32, i32
  }
  func.func @transform_3(%arg0: i32, %arg1: i32) -> (i32, i32) {
    %c0_i32 = arith.constant 0 : i32
    %c0_i32_0 = arith.constant 0 : i32
    return %arg0, %c0_i32 : i32, i32
  }
}

</mosaic_0001>

<llo_original>
// kernel: regressao_softmax_forward.1
$region0: #{regressao_softmax_forward.1}
  #allocation0 [shape = 'u32[]', space=smem, size = 0x4, offset = 0x4, fixed_abs, tag = 'smem constant byte address 0x4 - core index']
  #allocation1 [shape = 'u32[144,128]{1,0:T(1,128)}', space=vmem, size = 0x12000, scoped, tag = 'internal scratch']
  #allocation2 [shape = 'f32[8,128]{1,0:T(8,128)}', space=vmem, size = 0x1000, scoped, tag = 'scratch operand']
  %s0 = inlined_call_operand.hbm [shape: f32[8,32], index: 0, kind: input, shape index: {}]
  %s1 = inlined_call_operand.hbm [shape: f32[32,128], index: 1, kind: input, shape index: {}]
  %s2 = inlined_call_operand.vmem [shape: f32[1,128], index: 2, kind: input, shape index: {}]
  %s3 = inlined_call_operand.hbm [shape: f32[8,128], index: 3, kind: output, shape index: {}]
  %s4 = sld [smem:[#allocation0]]
  $region38: #{regressao_softmax_forward.1} parent=0
    _
  %s6 = ssub.s32 1, %s4
  %s7 = scalar_select 0, %s6, %s4
  $region1: #{regressao_softmax_forward.1} parent=0
    #allocation3 [shape = 'u8[4096]{0}', space=vmem, size = 0x1000, scoped, tag = 'input window, operand 0, single buffered']
    #allocation4 [shape = 's32[1]{0}', space=sflag, size = 0x4, scoped, tag = 'scoped memory for regressao_softmax_forward.1']
    #allocation5 [shape = 's32[1]{0}', space=sflag, size = 0x4, scoped, tag = 'scoped memory for regressao_softmax_forward.1']
    #allocation6 [shape = 'u8[16384]{0}', space=vmem, size = 0x4000, scoped, tag = 'input window, operand 1, single buffered']
    #allocation7 [shape = 's32[1]{0}', space=sflag, size = 0x4, scoped, tag = 'scoped memory for regressao_softmax_forward.1']
    #allocation8 [shape = 'u8[4096]{0}', space=vmem, size = 0x1000, scoped, tag = 'output window, operand 0, single buffered']
    %8 = vsyncpa [#allocation4], 0
    %9 = vsyncpa [#allocation7], 0
    %10 = vsyncpa [#allocation5], 0
    // Predicated region
    $region2: #{regressao_softmax_forward.1} parent=1 // pred_check
      _
    $region3: #{regressao_softmax_forward.1} parent=1 // pred_check_branch
      %12 = sbr.rel (0) target = $region5
    $region4: #{regressao_softmax_forward.1} parent=1 // pred_region
      %s14 = ssub.s32 128, 128
      %15 = vsyncadd [#allocation4], %s14
      %s17 = sshll.u32 [#allocation3], 4
      %s18 = int_to_ptr.vmem [resolvable:$true] %s17
      %20 = dma.hbm_to_vmem [thread:$0]  %s0, 128, %s18, [#allocation4]
    $region5: #{regressao_softmax_forward.1} parent=1 // pred_fallthru
      _
    // Predicated region
    $region6: #{regressao_softmax_forward.1} parent=1 // pred_check
      _
    $region7: #{regressao_softmax_forward.1} parent=1 // pred_check_branch
      %22 = sbr.rel (0) target = $region9
    $region8: #{regressao_softmax_forward.1} parent=1 // pred_region
      %s24 = ssub.s32 512, 512
      %25 = vsyncadd [#allocation7], %s24
      %s26 = sshll.u32 [#allocation6], 4
      %s27 = int_to_ptr.vmem [resolvable:$true] %s26
      %32 = dma.hbm_to_vmem [thread:$0]  %s1, 512, %s27, [#allocation7], 128, 128, 8
    $region9: #{regressao_softmax_forward.1} parent=1 // pred_fallthru
      _
    // Predicated region
    $region10: #{regressao_softmax_forward.1} parent=1 // pred_check
      _
    $region11: #{regressao_softmax_forward.1} parent=1 // pred_check_branch
      %34 = sbr.rel (0) target = $region13
    $region12: #{regressao_softmax_forward.1} parent=1 // pred_region
      _
    $region13: #{regressao_softmax_forward.1} parent=1 // pred_fallthru
      _
    // Predicated region
    $region14: #{regressao_softmax_forward.1} parent=1 // pred_check
      _
    $region15: #{regressao_softmax_forward.1} parent=1 // pred_check_branch
      %36 = sbr.rel (0) target = $region17
    $region16: #{regressao_softmax_forward.1} parent=1 // pred_region
      %37 = dma.done [#allocation4], 128
    $region17: #{regressao_softmax_forward.1} parent=1 // pred_fallthru
      _
    // Predicated region
    $region18: #{regressao_softmax_forward.1} parent=1 // pred_check
      _
    $region19: #{regressao_softmax_forward.1} parent=1 // pred_check_branch
      %39 = sbr.rel (0) target = $region21
    $region20: #{regressao_softmax_forward.1} parent=1 // pred_region
      %40 = dma.done [#allocation7], 512
    $region21: #{regressao_softmax_forward.1} parent=1 // pred_fallthru
      _
    %p41 = scmp.eq.s32.totalorder 0, 0
    // Predicated region
    $region22: #{regressao_softmax_forward.1} parent=1 // pred_check
      %p42 = pneg %p41
    $region23: #{regressao_softmax_forward.1} parent=1 // pred_check_branch
      %44 = sbr.rel (%p42) target = $region25
    $region24: #{regressao_softmax_forward.1} parent=1 // pred_region
      %45 = vst [vmem:[#allocation2] sm:$0xff] 0.0
    $region25: #{regressao_softmax_forward.1} parent=1 // pred_fallthru
      _
    %v46 = vld [vmem:[#allocation2] sm:$0xff]
    %v47 = vld [vmem:[#allocation3] sm:$0xff]
    %v48 = vld [vmem:[#allocation6] sm:$0xff]
    %v49 = vld [vmem:[#allocation6 + $0x8] sm:$0xff]
    %v50 = vld [vmem:[#allocation6 + $0x10] sm:$0xff]
    %v51 = vld [vmem:[#allocation6 + $0x18] sm:$0xff]
    %vm52 = vcmask 261120
    %v54 = vsel %vm52, %v47, 0
    %56 = vmatprep.subr.mxu0 0.0
    %57 = vmatpush1.msra.mxu0 %v48
    %58 = vmatprep.subr.mxu0 0.0
    %59 = vmatpush1.msra.mxu0 %v49
    %60 = vmatprep.subr.mxu0 0.0
    %61 = vmatpush1.msra.mxu0 %v50
    %62 = vmatprep.subr.mxu0 0.0
    %63 = vmatpush1.msra.mxu0 %v51
    %64 = vmatprep.subr.mxu0 0.0
    %65 = vmatpush1.msra.mxu0 0.0
    %66 = vmatprep.subr.mxu0 0.0
    %67 = vmatpush1.msra.mxu0 0.0
    %68 = vmatprep.subr.mxu0 0.0
    %69 = vmatpush1.msra.mxu0 0.0
    %70 = vmatprep.subr.mxu0 0.0
    %71 = vmatpush1.msra.mxu0 0.0
    %72 = vmatprep.subr.mxu0 0.0
    %73 = vmatpush1.msra.mxu0 0.0
    %74 = vmatprep.subr.mxu0 0.0
    %75 = vmatpush1.msra.mxu0 0.0
    %76 = vmatprep.subr.mxu0 0.0
    %77 = vmatpush1.msra.mxu0 0.0
    %78 = vmatprep.subr.mxu0 0.0
    %79 = vmatpush1.msra.mxu0 0.0
    %80 = vmatprep.subr.mxu0 0.0
    %81 = vmatpush1.msra.mxu0 0.0
    %82 = vmatprep.subr.mxu0 0.0
    %83 = vmatpush1.msra.mxu0 0.0
    %84 = vmatprep.subr.mxu0 0.0
    %85 = vmatpush1.msra.mxu0 0.0
    %86 = vmatprep.subr.mxu0 0.0
    %87 = vmatpush1.msra.mxu0 0.0
    %88 = vmatprep.subr.mxu0 0.0
    %89 = vmatpush1.msra.mxu0 0.0
    %90 = vmatprep.subr.mxu0 0.0
    %91 = vmatpush1.msra.mxu0 0.0
    %92 = vmatprep.subr.mxu0 0.0
    %93 = vmatpush1.msra.mxu0 0.0
    %94 = vmatprep.subr.mxu0 0.0
    %95 = vmatpush1.msra.mxu0 0.0
    %96 = vmatprep.subr.mxu0 0.0
    %97 = vmatpush1.msra.mxu0 0.0
    %98 = vmatprep.subr.mxu0 0.0
    %99 = vmatpush1.msra.mxu0 0.0
    %100 = vmatprep.subr.mxu0 0.0
    %101 = vmatpush1.msra.mxu0 0.0
    %102 = vmatprep.subr.mxu0 0.0
    %103 = vmatpush1.msra.mxu0 0.0
    %104 = vmatprep.subr.mxu0 0.0
    %105 = vmatpush1.msra.mxu0 0.0
    %106 = vmatprep.subr.mxu0 0.0
    %107 = vmatpush1.msra.mxu0 0.0
    %108 = vmatprep.subr.mxu0 0.0
    %109 = vmatpush1.msra.mxu0 0.0
    %110 = vmatprep.subr.mxu0 0.0
    %111 = vmatpush1.msra.mxu0 0.0
    %112 = vmatprep.subr.mxu0 0.0
    %113 = vmatpush1.msra.mxu0 0.0
    %114 = vmatprep.subr.mxu0 0.0
    %115 = vmatpush1.msra.mxu0 0.0
    %116 = vmatprep.subr.mxu0 0.0
    %117 = vmatpush1.msra.mxu0 0.0
    %118 = vmatprep.subr.mxu0 0.0
    %119 = vmatpush1.msra.mxu0 0.0
    %120 = vmatprep.mubr.f32.mxu0 0.0
    %121 = vmatmul.mubr.f32.gmra.mrb[0].mxu0 %v54
    %v122 = vpop.f32.mrb[0].mxu0
    %v123 = vadd.f32 0.0, %v122
    %v124 = vpop.f32.mrb[0].mxu0
    %125 = vdwg.mxu0
    %v126 = vadd.f32 %v46, %v123
    %127 = vst [vmem:[#allocation2] sm:$0xff] %v126
    // Predicated region
    $region26: #{regressao_softmax_forward.1} parent=1 // pred_check
      %p128 = pneg %p41
    $region27: #{regressao_softmax_forward.1} parent=1 // pred_check_branch
      %130 = sbr.rel (%p128) target = $region29
    $region28: #{regressao_softmax_forward.1} parent=1 // pred_region
      %v131 = vld [vmem:[#allocation2] sm:$0xff]
      %v132 = vld [vmem:[%s2] sm:$0x1]
      %v134 = vlaneseq
      %v135 = vshrl.u32 %v134, 7
      %v136 = vsub.s32 0, %v135
      %v137 = vrot.slane %v132, %v136
      %v139 = vadd.f32 %v131, %v137
      %140 = vst [vmem:[#allocation8] sm:$0xff] %v139
    $region29: #{regressao_softmax_forward.1} parent=1 // pred_fallthru
      _
    // Predicated region
    $region30: #{regressao_softmax_forward.1} parent=1 // pred_check
      _
    $region31: #{regressao_softmax_forward.1} parent=1 // pred_check_branch
      %142 = sbr.rel (0) target = $region33
    $region32: #{regressao_softmax_forward.1} parent=1 // pred_region
      %s144 = ssub.s32 128, 128
      %145 = vsyncadd [#allocation5], %s144
      %s147 = sshll.u32 [#allocation8], 4
      %s148 = int_to_ptr.vmem [resolvable:$true] %s147
      %150 = dma.vmem_to_hbm [thread:$0]  %s148, 128, %s3, [#allocation5]
    $region33: #{regressao_softmax_forward.1} parent=1 // pred_fallthru
      _
    // Predicated region
    $region34: #{regressao_softmax_forward.1} parent=1 // pred_check
      _
    $region35: #{regressao_softmax_forward.1} parent=1 // pred_check_branch
      %152 = sbr.rel (0) target = $region37
    $region36: #{regressao_softmax_forward.1} parent=1 // pred_region
      %153 = dma.done [#allocation5], 128
    $region37: #{regressao_softmax_forward.1} parent=1 // pred_fallthru
      _
    %154 = vsyncpa [#allocation4], 1
    %155 = vsyncpa [#allocation7], 1
    %156 = vsyncpa [#allocation5], 1

</llo_original>
